<compile_context>
chip_gen: v7x
topology: tpu7x:2x2x1
jax: 0.10.0
libtpu: 0.0.40
codegen_flags: <defaults>
</compile_context>

<pallas_src>
import jax
import jax.numpy as jnp
from jax.experimental import pallas as pl
from jax.experimental.pallas import tpu as pltpu


def _round_up(x, m):
    return (x + m - 1) // m * m


# ---------------------------------------------------------------------------
# Fast path: lane-packed argmax (A a power of two, A <= 128).
# ---------------------------------------------------------------------------
def _packed_argmax_kernel(x_ref, o_ref):
    """x_ref: [TR, L] (L = G*A lanes; each row holds G logical rows of A).

    o_ref: [TR, G] int32 -- per-segment (per logical row) argmax.
    """
    x = x_ref[...]
    vals = x.astype(jnp.float32)      # compare in f32; HBM/VMEM stay native dtype
    tr, L = vals.shape
    G = o_ref.shape[-1]
    A = L // G

    lane = jax.lax.broadcasted_iota(jnp.int32, (tr, L), 1)
    lo = lane - (lane & (A - 1))      # segment start lane (A is a power of two)
    hi = lo + (A - 1)

    best_v = vals
    best_i = lane

    # Segmented all-reduce: after ceil(log2(A)) steps every lane holds the
    # (value, index) maximum of its own segment under the total order
    # (NaN > everything, then value, then lower index).  Rolls go both
    # directions each step, so correctness does not depend on the rotate
    # convention; entries crossing a segment boundary (or wrapping around the
    # row) are rejected by the `in_seg` test on the index they carry.
    s = 1
    while s < A:
        for shift in (s, L - s):
            cv = pltpu.roll(best_v, shift, axis=1)
            ci = pltpu.roll(best_i, shift, axis=1)
            in_seg = (ci >= lo) & (ci <= hi)
            c_nan = cv != cv
            b_nan = best_v != best_v
            better = (
                (cv > best_v)
                | (c_nan & (~b_nan))
                | (((cv == best_v) | (c_nan & b_nan)) & (ci < best_i))
            )
            take = in_seg & better
            best_v = jnp.where(take, cv, best_v)
            best_i = jnp.where(take, ci, best_i)
        s *= 2

    # Local (within-segment) winner index, 0 <= loc < A <= 128: exact even in
    # the MXU's bf16 passes.
    loc = (best_i - lo).astype(jnp.float32)

    # Compact the per-segment winners into dense lanes with a one-hot selector
    # matmul on the (idle) MXU: out[r, g] = loc[r, g*A].
    row = jax.lax.broadcasted_iota(jnp.int32, (L, G), 0)
    col = jax.lax.broadcasted_iota(jnp.int32, (L, G), 1)
    sel = (row == col * A).astype(jnp.float32)
    o_ref[...] = jnp.dot(
        loc, sel, preferred_element_type=jnp.float32).astype(jnp.int32)


def _packed_argmax(xp, num_actions):
    """xp: [Rp, 128] packed view (G rows per packed row); returns [Rp*G] int32."""
    rp, L = xp.shape
    G = L // num_actions
    itemsize = jnp.dtype(xp.dtype).itemsize

    # ~1 MiB lane-dense input block (measured streaming sweet spot); keep at
    # least two row tiles when possible so both v7x TensorCores get work.
    cap = max(8, ((1 << 20) // (L * itemsize)) // 8 * 8)
    tr = max(8, min(cap, _round_up(pl.cdiv(rp, 2), 8)))
    if rp < 8:
        tr = rp
    grid = (pl.cdiv(rp, tr),)

    out = pl.pallas_call(
        _packed_argmax_kernel,
        out_shape=jax.ShapeDtypeStruct((rp, G), jnp.int32),
        grid=grid,
        in_specs=[pl.BlockSpec((tr, L), lambda i: (i, 0))],
        out_specs=pl.BlockSpec((tr, G), lambda i: (i, 0)),
        compiler_params=pltpu.CompilerParams(
            dimension_semantics=("parallel",),
            vmem_limit_bytes=32 * 1024 * 1024),
        cost_estimate=pl.CostEstimate(
            flops=4 * rp * L,
            transcendentals=0,
            bytes_accessed=rp * L * itemsize + rp * G * 4),
    )(xp)
    return out.reshape(rp * G)


# ---------------------------------------------------------------------------
# Fallback path: row-tiled argmax (any A, any R).
# ---------------------------------------------------------------------------
def _rows_argmax_kernel(x_ref, o_ref):
    """x_ref: [TR, A]; o_ref: [TR, 1] int32 (first index of the row max)."""
    x = x_ref[...].astype(jnp.float32)
    tr, a = x.shape
    col = jax.lax.broadcasted_iota(jnp.int32, (tr, a), 1)
    m = jnp.max(x, axis=-1, keepdims=True)
    hit = (x == m) | (x != x)             # (x != x): NaN rows -> first NaN index
    idx = jnp.where(hit, col, a)          # sentinel `a` never wins the min
    o_ref[...] = jnp.min(idx, axis=-1, keepdims=True)


def _rows_argmax(x2d):
    r, a = x2d.shape
    itemsize = jnp.dtype(x2d.dtype).itemsize

    # Double-buffered input <= ~8 MiB, TR capped at 256 (small-A vreg pressure).
    # TODO(synk): for extremely large A a second "arbitrary" grid axis over A
    # with running (max, argmax) scratch would bound blocks further; shrinking
    # TR covers all practical action counts.
    budget = 8 * 1024 * 1024
    cap = max(8, (budget // (2 * a * itemsize)) // 8 * 8)
    tr = max(8, min(256, cap, _round_up(pl.cdiv(r, 2), 8)))
    if r < 8:
        tr = r
    grid = (pl.cdiv(r, tr),)

    out = pl.pallas_call(
        _rows_argmax_kernel,
        out_shape=jax.ShapeDtypeStruct((r, 1), jnp.int32),
        grid=grid,
        in_specs=[pl.BlockSpec((tr, a), lambda i: (i, 0))],
        out_specs=pl.BlockSpec((tr, 1), lambda i: (i, 0)),
        compiler_params=pltpu.CompilerParams(
            dimension_semantics=("parallel",),
            vmem_limit_bytes=32 * 1024 * 1024),
        cost_estimate=pl.CostEstimate(
            flops=2 * r * a,
            transcendentals=0,
            bytes_accessed=r * a * itemsize + r * 4),
    )(x2d)
    return out.reshape(r)


# ---------------------------------------------------------------------------
# Wrapper (== ActionAdapter.forward).
# ---------------------------------------------------------------------------
@jax.jit
def action_adapter(q_values):
    """q_values: [batch, num_actions] or [batch, 2, num_actions] (any leading
    shape).  Returns int32 action indices with the leading shape.
    (torch.argmax returns int64; int32 is plenty for action ids.)
    """
    lead_shape = q_values.shape[:-1]
    a = q_values.shape[-1]
    x2d = q_values.reshape(-1, a)
    r = x2d.shape[0]

    packable = (a <= 128) and (128 % a == 0) and (r >= 128 // a)
    if packable:
        g = 128 // a
        r_main = (r // g) * g
        rp = r_main // g
        xm = x2d if r_main == r else x2d[:r_main]
        # Free view of the contiguous slab: each 128-lane row carries g rows.
        main = _packed_argmax(xm.reshape(rp, g * a), a)
        if r_main < r:
            # Fewer than g leftover rows: not worth another kernel launch.
            tail = jnp.argmax(x2d[r_main:], axis=-1).astype(jnp.int32)
            out = jnp.concatenate([main, tail])
        else:
            out = main
    else:
        # TODO(synk): non-power-of-two A (e.g. 18 Atari actions) could also be
        # lane-packed with L = lcm(A, 128); kept on the simple row-tiled path.
        out = _rows_argmax(x2d)

    return out.reshape(lead_shape)


if __name__ == "__main__":
    key = jax.random.PRNGKey(0)
    k1, k2, k3, k4, k5, k6 = jax.random.split(key, 6)

    # Case 1: [batch, A], tiny batch (row-tiled path since R < 128 // A).
    q1 = jax.random.normal(k1, (2, 8), dtype=jnp.float32)
    a1 = jax.block_until_ready(action_adapter(q1))
    assert a1.shape == (2,)
    assert bool(jnp.all(a1 == jnp.argmax(q1, axis=-1)))

    # Case 2: [batch, 2, A] dueling-style shape.
    q2 = jax.random.normal(k2, (2, 2, 8), dtype=jnp.float32)
    a2 = jax.block_until_ready(action_adapter(q2))
    assert a2.shape == (2, 2)
    assert bool(jnp.all(a2 == jnp.argmax(q2, axis=-1)))

    # Case 3: lane-packed fast path, multiple row tiles + ragged tail (A = 8).
    q3 = jax.random.normal(k3, (2500, 8), dtype=jnp.float32)
    a3 = jax.block_until_ready(action_adapter(q3))
    assert a3.shape == (2500,)
    assert bool(jnp.all(a3 == jnp.argmax(q3, axis=-1)))

    # Case 4: non-power-of-two A -> row-tiled fallback, multiple tiles.
    q4 = jax.random.normal(k4, (2500, 7), dtype=jnp.float32)
    a4 = jax.block_until_ready(action_adapter(q4))
    assert bool(jnp.all(a4 == jnp.argmax(q4, axis=-1)))

    # Case 5: bf16 input on the packed path (native-dtype DMA).
    q5 = jax.random.normal(k5, (512, 4), dtype=jnp.bfloat16)
    a5 = jax.block_until_ready(action_adapter(q5))
    assert bool(jnp.all(a5 == jnp.argmax(q5, axis=-1)))

    # Case 6: NaN row -> first NaN index; ties -> first max index (packed path).
    base = jax.random.normal(k6, (32, 8), dtype=jnp.float32)
    q6 = base.at[3].set(jnp.array(
        [0.0, 1.0, 2.0, float("nan"), 0.5, 3.0, -1.0, 0.0], jnp.float32))
    q6 = q6.at[17].set(jnp.array(
        [4.0, 1.0, 4.0, 0.0, -2.0, 1.0, 0.0, 2.0], jnp.float32))
    a6 = jax.block_until_ready(action_adapter(q6))
    assert int(a6[3]) == 3 and int(a6[17]) == 0
    mask = jnp.ones((32,), bool).at[3].set(False)   # skip NaN row vs jnp ref
    assert bool(jnp.all(jnp.where(mask, a6 == jnp.argmax(q6, axis=-1), True)))

    print("KERNEL_OK")
</pallas_src>

<mosaic_0001>
module attributes {stable_mosaic.version = 11 : i64} {
  func.func @_rows_argmax_kernel(%arg0: i32, %arg1: memref<2x8xf32, #tpu.memory_space<vmem>>, %arg2: memref<2x1xi32, #tpu.memory_space<vmem>>) attributes {dimension_semantics = [#tpu.dimension_semantics<parallel>], iteration_bounds = array<i64: 1>, scalar_prefetch = 0 : i64, scratch_operands = 0 : i64, tpu.core_type = #tpu.core_type<tc>, window_params = [{transform_indices = @transform_0, window_bounds = array<i64: 2, 8>}, {transform_indices = @transform_1, window_bounds = array<i64: 2, 1>}]} {
    %c0 = arith.constant 0 : index
    %c0_0 = arith.constant 0 : index
    %0 = vector.load %arg1[%c0, %c0_0] : memref<2x8xf32, #tpu.memory_space<vmem>>, vector<2x8xf32>
    %1 = tpu.iota {dimensions = array<i32: 1>} : vector<2x8xi32>
    %cst = arith.constant dense<0xFF800000> : vector<2xf32>
    %2 = vector.multi_reduction <maximumf>, %0, %cst [1] : vector<2x8xf32> to vector<2xf32>
    %3 = vector.shape_cast %2 : vector<2xf32> to vector<2x1xf32>
    %4 = vector.broadcast %3 : vector<2x1xf32> to vector<2x8xf32>
    %5 = arith.cmpf oeq, %0, %4 : vector<2x8xf32>
    %6 = arith.cmpf one, %0, %0 : vector<2x8xf32>
    %7 = arith.ori %5, %6 : vector<2x8xi1>
    %c8_i32 = arith.constant 8 : i32
    %8 = vector.broadcast %c8_i32 : i32 to vector<2x8xi32>
    %9 = arith.select %7, %1, %8 : vector<2x8xi1>, vector<2x8xi32>
    %cst_1 = arith.constant dense<2147483647> : vector<2xi32>
    %10 = vector.multi_reduction <minsi>, %9, %cst_1 [1] : vector<2x8xi32> to vector<2xi32>
    %11 = vector.shape_cast %10 : vector<2xi32> to vector<2x1xi32>
    %c0_2 = arith.constant 0 : index
    %c0_3 = arith.constant 0 : index
    %12 = vector.load %arg2[%c0_2, %c0_3] : memref<2x1xi32, #tpu.memory_space<vmem>>, vector<2x1xi32>
    tpu.vector_store %arg2[%c0_2, %c0_3], %11 {strides = array<i32>} : memref<2x1xi32, #tpu.memory_space<vmem>>, vector<2x1xi32>,
    return
  }
  func.func @transform_0(%arg0: i32) -> (i32, i32) {
    %c0_i32 = arith.constant 0 : i32
    %c0_i32_0 = arith.constant 0 : i32
    return %arg0, %c0_i32 : i32, i32
  }
  func.func @transform_1(%arg0: i32) -> (i32, i32) {
    %c0_i32 = arith.constant 0 : i32
    %c0_i32_0 = arith.constant 0 : i32
    return %arg0, %c0_i32 : i32, i32
  }
}

</mosaic_0001>

<llo_original>
// kernel: action_adapter.1
$region0: #{action_adapter.1}
  #allocation0 [shape = 'u32[]', space=smem, size = 0x4, offset = 0x4, fixed_abs, tag = 'smem constant byte address 0x4 - core index']
  #allocation1 [shape = 'u32[144,128]{1,0:T(1,128)}', space=vmem, size = 0x12000, scoped, tag = 'internal scratch']
  %s0 = inlined_call_operand.hbm [shape: f32[2,8], index: 0, kind: input, shape index: {}]
  %s1 = inlined_call_operand.vmem [shape: s32[2,1], index: 1, kind: output, shape index: {}]
  %s2 = sld [smem:[#allocation0]]
  $region18: #{action_adapter.1} parent=0
    _
  %s4 = ssub.s32 1, %s2
  %s5 = scalar_select 0, %s4, %s2
  $region1: #{action_adapter.1} parent=0
    #allocation2 [shape = 'u8[1024]{0}', space=vmem, size = 0x400, scoped, tag = 'input window, operand 0, single buffered']
    #allocation3 [shape = 's32[1]{0}', space=sflag, size = 0x4, scoped, tag = 'scoped memory for action_adapter.1']
    %6 = vsyncpa [#allocation3], 0
    // Predicated region
    $region2: #{action_adapter.1} parent=1 // pred_check
      _
    $region3: #{action_adapter.1} parent=1 // pred_check_branch
      %8 = sbr.rel (0) target = $region5
    $region4: #{action_adapter.1} parent=1 // pred_region
      %s10 = ssub.s32 32, 32
      %11 = vsyncadd [#allocation3], %s10
      %s13 = sshll.u32 [#allocation2], 4
      %s14 = int_to_ptr.vmem [resolvable:$true] %s13
      %16 = dma.hbm_to_vmem [thread:$0]  %s0, 32, %s14, [#allocation3]
    $region5: #{action_adapter.1} parent=1 // pred_fallthru
      _
    // Predicated region
    $region6: #{action_adapter.1} parent=1 // pred_check
      _
    $region7: #{action_adapter.1} parent=1 // pred_check_branch
      %18 = sbr.rel (0) target = $region9
    $region8: #{action_adapter.1} parent=1 // pred_region
      %19 = dma.done [#allocation3], 32
    $region9: #{action_adapter.1} parent=1 // pred_fallthru
      _
    %v20 = vld [vmem:[#allocation2] sm:$0x3]
    %v21 = vlaneseq
    %v22 = vand.u32 %v21, 127
    %vm23 = vcmask 58368
    %v24 = vsel %vm23, %v20, -inf
    %25 = vmax.xlane.f32.xlu0 %v24
    %v26 = vpop.xlane.xlu0 %25
    %vm27 = vcmp.eq.f32.partialorder %v20, %v26
    %vm28 = vcmp.ne.f32.partialorder %v20, %v20
    %vm29 = vmor %vm27, %vm28
    %v30 = vsel %vm29, %v22, 8
    %v31 = vsel %vm23, %v30, 2147483647
    %v32 = vand.u32 %v31, 65535
    %v33 = vshra.s32 %v31, 16
    %v34 = vcvt.s32.f32 %v32
    %v35 = vcvt.s32.f32 %v33
    %36 = vmin.xlane.f32.xlu0 %v35
    %v37 = vpop.xlane.xlu0 %36
    %vm38 = vcmp.eq.f32.partialorder %v35, %v37
    %v39 = vsel %vm38, %v34, inf
    %40 = vmin.xlane.f32.xlu0 %v39
    %v41 = vpop.xlane.xlu0 %40
    %v42 = vcvt.f32.s32 %v41
    %v43 = vcvt.f32.s32 %v37
    %v44 = vshll.u32 %v43, 16
    %v45 = vadd.s32 %v44, %v42
    %vm46 = vcmask 1024
    %47 = vst.msk [vmem:[%s1] sm:$0x3] %vm46, %v45
    // Predicated region
    $region10: #{action_adapter.1} parent=1 // pred_check
      _
    $region11: #{action_adapter.1} parent=1 // pred_check_branch
      %49 = sbr.rel (0) target = $region13
    $region12: #{action_adapter.1} parent=1 // pred_region
      _
    $region13: #{action_adapter.1} parent=1 // pred_fallthru
      _
    // Predicated region
    $region14: #{action_adapter.1} parent=1 // pred_check
      _
    $region15: #{action_adapter.1} parent=1 // pred_check_branch
      %51 = sbr.rel (0) target = $region17
    $region16: #{action_adapter.1} parent=1 // pred_region
      _
    $region17: #{action_adapter.1} parent=1 // pred_fallthru
      _
    %52 = vsyncpa [#allocation3], 1

</llo_original>
